<compile_context>
chip_gen: v7x
topology: tpu7x:2x2x1
jax: 0.10.0
libtpu: 0.0.40
codegen_flags: <defaults>
</compile_context>

<pallas_src>
import functools

import numpy as np

import jax
import jax.numpy as jnp
from jax.experimental import pallas as pl
from jax.experimental.pallas import tpu as pltpu


def _drop_path_kernel(x_ref, s_ref, o_ref):
    # (Bt, Nt) tile * (Bt, 1) per-row keep/scale -> lane-broadcast multiply.
    o_ref[...] = x_ref[...] * s_ref[...]


def _round_up(x, m):
    return ((x + m - 1) // m) * m


def _choose_tiles(B, N, dtype):
    """Pick (Bt, Nt): lane/sublane dense, balanced, ~2 MiB, megacore-aware."""
    LANE = 128
    itemsize = jnp.dtype(dtype).itemsize
    # dtype-aware sublane packing: 8 (f32), 16 (bf16/f16), 32 (int8/fp8).
    SUB = max(8, 32 // itemsize)

    # Lane tiling: balanced 128-multiple chunks, capped at 2048 lanes.
    Np0 = _round_up(N, LANE)
    nt_max = 2048
    n_blocks_n = pl.cdiv(Np0, nt_max)
    Nt = _round_up(pl.cdiv(Np0, n_blocks_n), LANE)

    # Sublane tiling: balanced SUB-multiple chunks under ~2 MiB per tile so the
    # double-buffered in+out working set (~4x tile) stays well inside the
    # scoped-VMEM defaults on v5e (16 MiB), v6e (32 MiB) and v7x (32/64 MiB).
    tile_budget = 2 * 1024 * 1024
    bt_max = max(SUB, (tile_budget // (Nt * itemsize)) // SUB * SUB)
    Bp0 = _round_up(B, SUB)
    n_blocks_b = pl.cdiv(Bp0, bt_max)
    Bt = _round_up(pl.cdiv(Bp0, n_blocks_b), SUB)

    # v7x megacore: guarantee >= 2 grid blocks along a "parallel" axis when the
    # whole tensor would otherwise be a single tile (otherwise one TC idles).
    if pl.cdiv(B, Bt) * pl.cdiv(N, Nt) < 2:
        if Bp0 >= 2 * SUB:
            Bt = _round_up(pl.cdiv(Bp0, 2), SUB)
        elif Np0 >= 2 * LANE:
            Nt = _round_up(pl.cdiv(Np0, 2), LANE)

    return Bt, Nt


@functools.partial(jax.jit, static_argnames=("drop_prob", "scale_by_keep"))
def _drop_path_impl(x, key, *, drop_prob, scale_by_keep):
    keep_prob = 1.0 - drop_prob
    B = x.shape[0]
    N = int(np.prod(x.shape[1:])) if x.ndim > 1 else 1
    x2 = x.reshape(B, N)

    # Per-sample keep/scale vector (deterministic in `key`, computed once per
    # call inside the same jitted executable as the kernel).
    keep = jax.random.bernoulli(key, p=keep_prob, shape=(B,))
    scale_val = (1.0 / keep_prob) if (keep_prob > 0.0 and scale_by_keep) else 1.0
    scale = jnp.where(keep, scale_val, 0.0).astype(x.dtype).reshape(B, 1)

    Bt, Nt = _choose_tiles(B, N, x.dtype)
    grid = (pl.cdiv(B, Bt), pl.cdiv(N, Nt))

    out = pl.pallas_call(
        _drop_path_kernel,
        out_shape=jax.ShapeDtypeStruct((B, N), x.dtype),
        grid=grid,
        in_specs=[
            pl.BlockSpec((Bt, Nt), lambda bi, ni: (bi, ni)),
            pl.BlockSpec((Bt, 1), lambda bi, ni: (bi, 0)),
        ],
        out_specs=pl.BlockSpec((Bt, Nt), lambda bi, ni: (bi, ni)),
        compiler_params=pltpu.CompilerParams(
            dimension_semantics=("parallel", "parallel"),
        ),
    )(x2, scale)

    return out.reshape(x.shape)


def drop_path_pallas(x, key, drop_prob=0.1, training=True, scale_by_keep=True):
    """JAX/Pallas equivalent of torch drop_path(x, drop_prob, training, scale_by_keep).

    `key` is a jax PRNG key; the mask is deterministic in it (vary it per step).
    """
    if drop_prob == 0.0 or not training:
        return x
    return _drop_path_impl(
        x, key, drop_prob=float(drop_prob), scale_by_keep=bool(scale_by_keep)
    )


class DropPath:
    """Mirror of the PyTorch DropPath module (forward semantics only)."""

    def __init__(self, drop_prob=None, scale_by_keep=True):
        self.drop_prob = drop_prob if drop_prob is not None else 0.0
        self.scale_by_keep = scale_by_keep
        self.training = True

    def __call__(self, x, key):
        return drop_path_pallas(
            x, key, self.drop_prob, self.training, self.scale_by_keep
        )


if __name__ == "__main__":
    key = jax.random.PRNGKey(0)
    # Small NCHW-like input: batch=2, channels=4, spatial=16x16.
    x = jax.random.normal(key, (2, 4, 16, 16), dtype=jnp.float32)

    module = DropPath(drop_prob=0.1, scale_by_keep=True)
    module.training = True
    mask_key = jax.random.PRNGKey(1234)
    y = jax.block_until_ready(module(x, mask_key))

    # Sanity: each sample is either zeroed or scaled by exactly 1/keep_prob.
    keep_prob = 1.0 - module.drop_prob
    for b in range(x.shape[0]):
        xb = np.asarray(x[b])
        yb = np.asarray(y[b])
        nz = np.abs(xb) > 1e-6
        ratio = yb[nz] / xb[nz]
        assert (
            np.allclose(ratio, 0.0)
            or np.allclose(ratio, 1.0 / keep_prob, rtol=1e-5)
        ), ratio

    # Non-tile-multiple shape exercises partial-last-block handling
    # (no jnp.pad / slice passes around the kernel anymore).
    x_odd = jax.random.normal(jax.random.PRNGKey(7), (3, 5, 7, 9), jnp.float32)
    odd_key = jax.random.PRNGKey(99)
    y_odd = jax.block_until_ready(drop_path_pallas(x_odd, odd_key, 0.5, True, True))
    keep_odd = np.asarray(jax.random.bernoulli(odd_key, p=0.5, shape=(3,)))
    ref_odd = np.asarray(x_odd) * np.where(keep_odd, 2.0, 0.0)[:, None, None, None]
    assert np.allclose(np.asarray(y_odd), ref_odd, rtol=1e-6, atol=1e-6)

    # Eval mode / drop_prob == 0 -> identity.
    module.training = False
    y_eval = jax.block_until_ready(module(x, mask_key))
    assert np.array_equal(np.asarray(y_eval), np.asarray(x))

    print("KERNEL_OK")
</pallas_src>

<mosaic_0001>
module attributes {stable_mosaic.version = 11 : i64} {
  func.func @_drop_path_kernel(%arg0: i32, %arg1: i32, %arg2: memref<8x512xf32, #tpu.memory_space<vmem>>, %arg3: memref<8x1xf32, #tpu.memory_space<vmem>>, %arg4: memref<8x512xf32, #tpu.memory_space<vmem>>) attributes {dimension_semantics = [#tpu.dimension_semantics<parallel>, #tpu.dimension_semantics<parallel>], iteration_bounds = array<i64: 1, 2>, scalar_prefetch = 0 : i64, scratch_operands = 0 : i64, tpu.core_type = #tpu.core_type<tc>, window_params = [{transform_indices = @transform_0, window_bounds = array<i64: 8, 512>}, {transform_indices = @transform_1, window_bounds = array<i64: 8, 1>}, {transform_indices = @transform_2, window_bounds = array<i64: 8, 512>}]} {
    %c0 = arith.constant 0 : index
    %c0_0 = arith.constant 0 : index
    %0 = vector.load %arg2[%c0, %c0_0] : memref<8x512xf32, #tpu.memory_space<vmem>>, vector<8x512xf32>
    %c0_1 = arith.constant 0 : index
    %c0_2 = arith.constant 0 : index
    %1 = vector.load %arg3[%c0_1, %c0_2] : memref<8x1xf32, #tpu.memory_space<vmem>>, vector<8x1xf32>
    %2 = vector.broadcast %1 : vector<8x1xf32> to vector<8x512xf32>
    %3 = arith.mulf %0, %2 : vector<8x512xf32>
    %c0_3 = arith.constant 0 : index
    %c0_4 = arith.constant 0 : index
    %4 = vector.load %arg4[%c0_3, %c0_4] : memref<8x512xf32, #tpu.memory_space<vmem>>, vector<8x512xf32>
    tpu.vector_store %arg4[%c0_3, %c0_4], %3 {strides = array<i32>} : memref<8x512xf32, #tpu.memory_space<vmem>>, vector<8x512xf32>,
    return
  }
  func.func @transform_0(%arg0: i32, %arg1: i32) -> (i32, i32) {
    %c0_i32 = arith.constant 0 : i32
    return %arg0, %arg1 : i32, i32
  }
  func.func @transform_1(%arg0: i32, %arg1: i32) -> (i32, i32) {
    %c0_i32 = arith.constant 0 : i32
    %c0_i32_0 = arith.constant 0 : i32
    return %arg0, %c0_i32 : i32, i32
  }
  func.func @transform_2(%arg0: i32, %arg1: i32) -> (i32, i32) {
    %c0_i32 = arith.constant 0 : i32
    return %arg0, %arg1 : i32, i32
  }
}

</mosaic_0001>

<llo_original>
// kernel: _drop_path_impl.1
$region0: #{_drop_path_impl.1}
  #allocation0 [shape = 'u32[]', space=smem, size = 0x4, offset = 0x4, fixed_abs, tag = 'smem constant byte address 0x4 - core index']
  #allocation1 [shape = 'u32[144,128]{1,0:T(1,128)}', space=vmem, size = 0x12000, scoped, tag = 'internal scratch']
  %s0 = inlined_call_operand.vmem [shape: f32[2,1024], index: 0, kind: input, shape index: {}]
  %s1 = inlined_call_operand.vmem [shape: f32[2,1], index: 1, kind: input, shape index: {}]
  %s2 = inlined_call_operand.vmem [shape: f32[2,1024], index: 2, kind: output, shape index: {}]
  %s3 = sld [smem:[#allocation0]]
  $region113: #{_drop_path_impl.1} parent=0
    _
  %s5 = ssub.s32 1, %s3
  %s6 = scalar_select 0, %s5, %s3
  $region1: #{_drop_path_impl.1} parent=0
    #allocation2 [shape = 'u8[32768]{0}', space=vmem, size = 0x8000, scoped, tag = 'input window, operand 0']
    #allocation3 [shape = 'u8[32768]{0}', space=vmem, size = 0x8000, scoped, tag = 'output window, operand 0']
    loop: start=0, step=1, limit=4
    $region2: #{_drop_path_impl.1} parent=1 // loop_pre_header
      _
    $region3: #{_drop_path_impl.1} parent=1 // loop_header
      %s8 = sphi 0, %s12
      %p9 = scmp.ge.s32.totalorder %s8, 4
      %s15 = sphi 0, %s27
      %s16 = sphi 0, %s23
      %s17 = sphi 0, %s15
      %s18 = sphi 0, %s16
      %s19 = sphi 0, %s17
      %s20 = sphi 0, %s18
      %s32 = sphi 0, %s34
      %s35 = sphi 0, %s32
      %s36 = sphi 0, %s35
      %s52 = sphi 0, %s36
      %s58 = sphi 0, %s60
      %s61 = sphi 0, %s58
      %s62 = sphi 0, %s61
      %s78 = sphi 0, %s62
      %s86 = sphi 0, %s88
      %s89 = sphi 0, %s86
      %s90 = sphi 0, %s89
      %s106 = sphi 0, %s90
    $region4: #{_drop_path_impl.1} parent=1 // loop_header_branch
      %11 = sbr.rel (%p9) target = $region8
    $region5: #{_drop_path_impl.1} parent=1 // loop_body
      %s13 = ssub.s32 %s8, 1
      %s14 = ssub.s32 %s8, 2
      %s21 = sadd.s32 1, %s16
      %p22 = scmp.ge.s32.totalorder %s21, 2
      %s23 = scalar_select %p22, 0, %s21
      %s24 = sadd.s32 1, %s15
      %s25 = scalar_select %p22, %s24, %s15
      %p26 = scmp.ge.s32.totalorder %s25, 1
      %s27 = scalar_select %p26, 0, %s25
      %s28 = ssub.s32 %s15, %s27
      %s29 = ssub.s32 %s16, %s23
      %s30 = sor.u32 %s28, %s29
      %p31 = scmp.eq.s32.totalorder %s30, 0
      %s33 = sadd.s32 %s32, 1
      %s34 = scalar_select %p31, %s32, %s33
      %p37 = pneg %p31
      %p38 = scmp.eq.s32.totalorder %s8, 1
      %p39 = por %p37, %p38
      %p40 = scmp.ne.s32.totalorder %s32, %s35
      %p41 = scmp.eq.s32.totalorder %s8, 0
      %p42 = por %p40, %p41
      %p43 = scmp.ne.s32.totalorder %s32, %s35
      %p44 = scmp.eq.s32.totalorder %s13, 1
      %p45 = por %p43, %p44
      %p46 = scmp.ne.s32.totalorder %s35, %s36
      %p47 = scmp.eq.s32.totalorder %s13, 0
      %p48 = por %p46, %p47
      %p49 = scmp.ne.s32.totalorder %s35, %s36
      %p50 = scmp.eq.s32.totalorder %s14, 1
      %p51 = por %p49, %p50
      %p53 = scmp.ne.s32.totalorder %s36, %s52
      %p54 = scmp.eq.s32.totalorder %s14, 0
      %p55 = por %p53, %p54
      %s56 = ssub.s32 %s15, %s27
      %p57 = scmp.eq.s32.totalorder %s56, 0
      %s59 = sadd.s32 %s58, 1
      %s60 = scalar_select %p57, %s58, %s59
      %p63 = pneg %p57
      %p64 = scmp.eq.s32.totalorder %s8, 1
      %p65 = por %p63, %p64
      %p66 = scmp.ne.s32.totalorder %s58, %s61
      %p67 = scmp.eq.s32.totalorder %s8, 0
      %p68 = por %p66, %p67
      %p69 = scmp.ne.s32.totalorder %s58, %s61
      %p70 = scmp.eq.s32.totalorder %s13, 1
      %p71 = por %p69, %p70
      %p72 = scmp.ne.s32.totalorder %s61, %s62
      %p73 = scmp.eq.s32.totalorder %s13, 0
      %p74 = por %p72, %p73
      %p75 = scmp.ne.s32.totalorder %s61, %s62
      %p76 = scmp.eq.s32.totalorder %s14, 1
      %p77 = por %p75, %p76
      %p79 = scmp.ne.s32.totalorder %s62, %s78
      %p80 = scmp.eq.s32.totalorder %s14, 0
      %p81 = por %p79, %p80
      %s82 = ssub.s32 %s15, %s27
      %s83 = ssub.s32 %s16, %s23
      %s84 = sor.u32 %s82, %s83
      %p85 = scmp.eq.s32.totalorder %s84, 0
      %s87 = sadd.s32 %s86, 1
      %s88 = scalar_select %p85, %s86, %s87
      %p91 = pneg %p85
      %p92 = scmp.eq.s32.totalorder %s8, 1
      %p93 = por %p91, %p92
      %p94 = scmp.ne.s32.totalorder %s86, %s89
      %p95 = scmp.eq.s32.totalorder %s8, 0
      %p96 = por %p94, %p95
      %p97 = scmp.ne.s32.totalorder %s86, %s89
      %p98 = scmp.eq.s32.totalorder %s13, 1
      %p99 = por %p97, %p98
      %p100 = scmp.ne.s32.totalorder %s89, %s90
      %p101 = scmp.eq.s32.totalorder %s13, 0
      %p102 = por %p100, %p101
      %p103 = scmp.ne.s32.totalorder %s89, %s90
      %p104 = scmp.eq.s32.totalorder %s14, 1
      %p105 = por %p103, %p104
      %p107 = scmp.ne.s32.totalorder %s90, %s106
      %p108 = scmp.eq.s32.totalorder %s14, 0
      %p109 = por %p107, %p108
      %p110 = scmp.le.s32.totalorder 1, %s8
      %p111 = scmp.lt.s32.totalorder %s8, 3
      %p112 = pnand %p110, %p111
      %p113 = pneg %p112
      // Predicated region
      $region9: #{_drop_path_impl.1} parent=5 // pred_check
        _
      $region10: #{_drop_path_impl.1} parent=5 // pred_check_branch
        %115 = sbr.rel (%p112) target = $region12
      $region11: #{_drop_path_impl.1} parent=5 // pred_region
        %s116 = ssub.s32 %s8, 1
        // Predicated region
        $region13: #{_drop_path_impl.1} parent=11 // pred_check
          %p117 = pneg %p74
        $region14: #{_drop_path_impl.1} parent=11 // pred_check_branch
          %119 = sbr.rel (%p117) target = $region16
        $region15: #{_drop_path_impl.1} parent=11 // pred_region
          %s120 = smul.u32 4, %s17
          %s121 = ssub.s32 1, %s120
          %s122 = smul.u32 32, %s121
          %p123 = scmp.lt.s32.totalorder %s120, 0
          %s124 = scalar_select %p123, %s120, 0
          %s125 = smul.addr %s124, 2
          %s126 = scalar_lea.vmem %s1, %s125
          %s127 = smul.u32 4, %s17
          %s128 = ssub.s32 1, %s127
          %s129 = smul.u32 32, %s128
        $region16: #{_drop_path_impl.1} parent=11 // pred_fallthru
          _
      $region12: #{_drop_path_impl.1} parent=5 // pred_fallthru
        _
      %p130 = scmp.lt.s32.totalorder %s8, 2
      // Predicated region
      $region17: #{_drop_path_impl.1} parent=5 // pred_check
        %p131 = pneg %p130
      $region18: #{_drop_path_impl.1} parent=5 // pred_check_branch
        %133 = sbr.rel (%p131) target = $region20
      $region19: #{_drop_path_impl.1} parent=5 // pred_region
        // Predicated region
        $region21: #{_drop_path_impl.1} parent=19 // pred_check
          %p134 = pneg %p42
        $region22: #{_drop_path_impl.1} parent=19 // pred_check_branch
          %136 = sbr.rel (%p134) target = $region24
        $region23: #{_drop_path_impl.1} parent=19 // pred_region
          %s137 = sand.u32 %s32, 1
          %s138 = sand.u32 %s32, 1
          %s139 = smul.addr %s138, 32
          %s140 = scalar_lea.vmem [#allocation2], %s139
          %s141 = smul.u32 4, %s15
          %s142 = smul.u32 4, %s16
          %s143 = ssub.s32 1, %s141
          %s144 = smul.u32 32, %s143
          %s145 = smul.u32 %s144, 4
          %p146 = scmp.ne.s32.totalorder 0, %s145
          %s147 = smul.addr %s141, 8
          %s148 = sadd.s32 %s142, %s147
          %s149 = smul.addr %s148, 2
          %s150 = scalar_lea.vmem %s0, %s149
          // Predicated region
          $region25: #{_drop_path_impl.1} parent=23 // pred_check
            %p151 = pneg %p146
          $region26: #{_drop_path_impl.1} parent=23 // pred_check_branch
            %153 = sbr.rel (%p151) target = $region28
          $region27: #{_drop_path_impl.1} parent=23 // pred_region
            // Predicated region
            $region29: #{_drop_path_impl.1} parent=27 // pred_check
              _
            $region30: #{_drop_path_impl.1} parent=27 // pred_check_branch
              %155 = sbr.rel (0) target = $region32
            $region31: #{_drop_path_impl.1} parent=27 // pred_region
              // Predicated region
              $region44: #{_drop_path_impl.1} parent=31 // pred_check
                _
              $region45: #{_drop_path_impl.1} parent=31 // pred_check_branch
                %178 = sbr.rel (0) target = $region47
              $region46: #{_drop_path_impl.1} parent=31 // pred_region
                // While loop
                $region48: #{_drop_path_impl.1} parent=46 // loop_pre_header
                  _
                $region49: #{_drop_path_impl.1} parent=46 // loop_header
                  %s180 = sphi 0, %s182
                  %p181 = scmp.ge.s32.totalorder %s180, %s143
                  %s185 = sphi 0, %s192
                  %s186 = sphi %s150, %s195
                  %s187 = sphi %s140, %s196
                $region50: #{_drop_path_impl.1} parent=46 // loop_header_branch
                  %184 = sbr.rel (%p181) target = $region54
                $region51: #{_drop_path_impl.1} parent=46 // loop_body
                  %v188 = vld [vmem:[%s186] sm:$0xff]
                  %189 = vst [vmem:[%s187] sm:$0xff] %v188
                  %s190 = sadd.s32 1, %s185
                  %p191 = scmp.ge.s32.totalorder %s190, %s143
                  %s192 = scalar_select %p191, 0, %s190
                  %s193 = smul.u32 %s192, 16
                  %s194 = smul.u32 %s192, 8
                  %s195 = scalar_lea.vmem %s150, %s193
                  %s196 = scalar_lea.vmem %s140, %s194 [#allocation2]
                $region52: #{_drop_path_impl.1} parent=46 // loop_footer
                  %s182 = sadd.s32 %s180, 1
                $region53: #{_drop_path_impl.1} parent=46 // loop_footer_branch
                  %179 = sbr.rel target = $region49
                $region54: #{_drop_path_impl.1} parent=46 // loop_exit
                  _
              $region47: #{_drop_path_impl.1} parent=31 // pred_fallthru
                _
              // Predicated region
              $region55: #{_drop_path_impl.1} parent=31 // pred_check
                _
              $region56: #{_drop_path_impl.1} parent=31 // pred_check_branch
                %198 = sbr.rel target = $region58
              $region57: #{_drop_path_impl.1} parent=31 // pred_region
                _
              $region58: #{_drop_path_impl.1} parent=31 // pred_fallthru
                _
            $region32: #{_drop_path_impl.1} parent=27 // pred_fallthru
              _
            // Predicated region
            $region33: #{_drop_path_impl.1} parent=27 // pred_check
              _
            $region34: #{_drop_path_impl.1} parent=27 // pred_check_branch
              %157 = sbr.rel target = $region36
            $region35: #{_drop_path_impl.1} parent=27 // pred_region
              // While loop
              $region37: #{_drop_path_impl.1} parent=35 // loop_pre_header
                _
              $region38: #{_drop_path_impl.1} parent=35 // loop_header
                %s160 = sphi 0, %s162
                %p161 = scmp.ge.s32.totalorder %s160, %s143
                %s165 = sphi 0, %s172
                %s166 = sphi %s150, %s175
                %s167 = sphi %s140, %s176
              $region39: #{_drop_path_impl.1} parent=35 // loop_header_branch
                %164 = sbr.rel (%p161) target = $region43
              $region40: #{_drop_path_impl.1} parent=35 // loop_body
                %v168 = vld [vmem:[%s166] sm:$0xff]
                %169 = vst [vmem:[%s167] sm:$0xff] %v168
                %s170 = sadd.s32 1, %s165
                %p171 = scmp.ge.s32.totalorder %s170, %s143
                %s172 = scalar_select %p171, 0, %s170
                %s173 = smul.u32 %s172, 16
                %s174 = smul.u32 %s172, 8
                %s175 = scalar_lea.vmem %s150, %s173
                %s176 = scalar_lea.vmem %s140, %s174 [#allocation2]
              $region41: #{_drop_path_impl.1} parent=35 // loop_footer
                %s162 = sadd.s32 %s160, 1
              $region42: #{_drop_path_impl.1} parent=35 // loop_footer_branch
                %159 = sbr.rel target = $region38
              $region43: #{_drop_path_impl.1} parent=35 // loop_exit
                _
            $region36: #{_drop_path_impl.1} parent=27 // pred_fallthru
              _
          $region28: #{_drop_path_impl.1} parent=23 // pred_fallthru
            _
          %199 = vnop
        $region24: #{_drop_path_impl.1} parent=19 // pred_fallthru
          _
      $region20: #{_drop_path_impl.1} parent=5 // pred_fallthru
        _
      %p200 = scmp.le.s32.totalorder 1, %s8
      %p201 = scmp.lt.s32.totalorder %s8, 3
      %p202 = pnand %p200, %p201
      %p203 = pneg %p202
      // Predicated region
      $region59: #{_drop_path_impl.1} parent=5 // pred_check
        _
      $region60: #{_drop_path_impl.1} parent=5 // pred_check_branch
        %205 = sbr.rel (%p202) target = $region62
      $region61: #{_drop_path_impl.1} parent=5 // pred_region
        %s206 = ssub.s32 %s8, 1
        %s207 = sand.u32 %s35, 1
        %s208 = sand.u32 %s35, 1
        %s209 = smul.addr %s208, 32
        %s210 = scalar_lea.vmem [#allocation2], %s209
        // Predicated region
        $region63: #{_drop_path_impl.1} parent=61 // pred_check
          %p211 = pneg %p48
        $region64: #{_drop_path_impl.1} parent=61 // pred_check_branch
          %213 = sbr.rel (%p211) target = $region66
        $region65: #{_drop_path_impl.1} parent=61 // pred_region
          _
        $region66: #{_drop_path_impl.1} parent=61 // pred_fallthru
          _
        %s214 = sand.u32 %s35, 1
        %s215 = sand.u32 %s35, 1
        %s216 = smul.addr %s215, 32
        %s217 = scalar_lea.vmem [#allocation2], %s216
        %p218 = pneg %p48
        %p219 = pneg %p45
        %s220 = smul.u32 4, %s17
        %s221 = ssub.s32 1, %s220
        %s222 = smul.u32 32, %s221
        %p223 = scmp.lt.s32.totalorder %s220, 0
        %s224 = scalar_select %p223, %s220, 0
        %s225 = smul.addr %s224, 2
        %s226 = scalar_lea.vmem %s1, %s225
        %p227 = pneg %p74
        %p228 = pneg %p71
        %p229 = pneg %p102
        %p230 = pneg %p99
        %s231 = sand.u32 %s89, 1
        %s232 = sand.u32 %s89, 1
        %s233 = smul.addr %s232, 32
        %s234 = scalar_lea.vmem [#allocation3], %s233
        %s235 = smul.u32 4, %s17
        %s236 = smul.u32 4, %s18
        %s237 = ssub.s32 1, %s235
        %s238 = smul.u32 32, %s237
        %s239 = smul.u32 %s238, 4
        %s240 = smul.u32 4, %s17
        %s241 = ssub.s32 1, %s240
        %s242 = smul.u32 32, %s241
        %p243 = scmp.lt.s32.totalorder %s240, 0
        %s244 = scalar_select %p243, %s240, 0
        %s245 = smul.addr %s244, 2
        %s246 = scalar_lea.vmem %s1, %s245
        %s247 = smul.u32 4, %s17
        %s248 = ssub.s32 1, %s247
        %s249 = smul.u32 32, %s248
        %s250 = smul.u32 4, %s17
        %s251 = smul.u32 4, %s18
        %s252 = ssub.s32 1, %s250
        %s253 = smul.u32 32, %s252
        %s254 = smul.u32 %s253, 4
        %v255 = vld [vmem:[%s210] sm:$0xff]
        %v256 = vld [vmem:[%s210 + $0x8] sm:$0xff]
        %v257 = vld [vmem:[%s210 + $0x10] sm:$0xff]
        %v258 = vld [vmem:[%s210 + $0x18] sm:$0xff]
        %v259 = vld [vmem:[%s246] sm:$0xff]
        %261 = vset.pattern.permute.xlu0 0
        %262 = vperm.xlu0 %261, %v259
        %v263 = vpop.permute.xlu0 %262
        %v265 = vunpack.c.l.s4 269488144
        %v266 = vunpack.c.0.s8 %v265
        %v267 = vlaneseq
        %v268 = vshrl.u32 %v267, 7
        %v269 = vsub.s32 %v266, %v268
        %v270 = vrot.slane %v263, %v269
        %v272 = vunpack.c.l.s4 842150450
        %v273 = vunpack.c.0.s8 %v272
        %v274 = vlaneseq
        %v275 = vshrl.u32 %v274, 7
        %v276 = vsub.s32 %v273, %v275
        %v277 = vrot.slane %v263, %v276
        %v279 = vunpack.c.l.s4 1414812756
        %v280 = vunpack.c.0.s8 %v279
        %v281 = vlaneseq
        %v282 = vshrl.u32 %v281, 7
        %v283 = vsub.s32 %v280, %v282
        %v284 = vrot.slane %v263, %v283
        %v286 = vunpack.c.l.s4 1987475062
        %v287 = vunpack.c.0.s8 %v286
        %v288 = vlaneseq
        %v289 = vshrl.u32 %v288, 7
        %v290 = vsub.s32 %v287, %v289
        %v291 = vrot.slane %v263, %v290
        %v296 = vmul.f32 %v255, %v270
        %v297 = vmul.f32 %v256, %v277
        %v298 = vmul.f32 %v257, %v284
        %v299 = vmul.f32 %v258, %v291
        %300 = vst [vmem:[%s234] sm:$0xff] %v296
        %301 = vst [vmem:[%s234 + $0x8] sm:$0xff] %v297
        %302 = vst [vmem:[%s234 + $0x10] sm:$0xff] %v298
        %303 = vst [vmem:[%s234 + $0x18] sm:$0xff] %v299
        %s304 = sand.u32 %s89, 1
        %s305 = sand.u32 %s89, 1
        %s306 = smul.addr %s305, 32
        %s307 = scalar_lea.vmem [#allocation3], %s306
        // Predicated region
        $region67: #{_drop_path_impl.1} parent=61 // pred_check
          %p308 = pneg %p99
        $region68: #{_drop_path_impl.1} parent=61 // pred_check_branch
          %310 = sbr.rel (%p308) target = $region70
        $region69: #{_drop_path_impl.1} parent=61 // pred_region
          %s311 = smul.u32 4, %s17
          %s312 = smul.u32 4, %s18
          %s313 = ssub.s32 1, %s311
          %s314 = smul.u32 32, %s313
          %s315 = smul.u32 %s314, 4
          %p316 = scmp.ne.s32.totalorder 0, %s315
          %s317 = smul.addr %s311, 8
          %s318 = sadd.s32 %s312, %s317
          %s319 = smul.addr %s318, 2
          %s320 = scalar_lea.vmem %s2, %s319
          // Predicated region
          $region71: #{_drop_path_impl.1} parent=69 // pred_check
            %p321 = pneg %p316
          $region72: #{_drop_path_impl.1} parent=69 // pred_check_branch
            %323 = sbr.rel (%p321) target = $region74
          $region73: #{_drop_path_impl.1} parent=69 // pred_region
            // Predicated region
            $region75: #{_drop_path_impl.1} parent=73 // pred_check
              _
            $region76: #{_drop_path_impl.1} parent=73 // pred_check_branch
              %325 = sbr.rel (0) target = $region78
            $region77: #{_drop_path_impl.1} parent=73 // pred_region
              // Predicated region
              $region90: #{_drop_path_impl.1} parent=77 // pred_check
                _
              $region91: #{_drop_path_impl.1} parent=77 // pred_check_branch
                %348 = sbr.rel (0) target = $region93
              $region92: #{_drop_path_impl.1} parent=77 // pred_region
                // While loop
                $region94: #{_drop_path_impl.1} parent=92 // loop_pre_header
                  _
                $region95: #{_drop_path_impl.1} parent=92 // loop_header
                  %s350 = sphi 0, %s352
                  %p351 = scmp.ge.s32.totalorder %s350, %s313
                  %s355 = sphi 0, %s362
                  %s356 = sphi %s307, %s365
                  %s357 = sphi %s320, %s366
                $region96: #{_drop_path_impl.1} parent=92 // loop_header_branch
                  %354 = sbr.rel (%p351) target = $region100
                $region97: #{_drop_path_impl.1} parent=92 // loop_body
                  %v358 = vld [vmem:[%s356] sm:$0xff]
                  %359 = vst [vmem:[%s357] sm:$0xff] %v358
                  %s360 = sadd.s32 1, %s355
                  %p361 = scmp.ge.s32.totalorder %s360, %s313
                  %s362 = scalar_select %p361, 0, %s360
                  %s363 = smul.u32 %s362, 8
                  %s364 = smul.u32 %s362, 16
                  %s365 = scalar_lea.vmem %s307, %s363 [#allocation3]
                  %s366 = scalar_lea.vmem %s320, %s364
                $region98: #{_drop_path_impl.1} parent=92 // loop_footer
                  %s352 = sadd.s32 %s350, 1
                $region99: #{_drop_path_impl.1} parent=92 // loop_footer_branch
                  %349 = sbr.rel target = $region95
                $region100: #{_drop_path_impl.1} parent=92 // loop_exit
                  _
              $region93: #{_drop_path_impl.1} parent=77 // pred_fallthru
                _
              // Predicated region
              $region101: #{_drop_path_impl.1} parent=77 // pred_check
                _
              $region102: #{_drop_path_impl.1} parent=77 // pred_check_branch
                %368 = sbr.rel target = $region104
              $region103: #{_drop_path_impl.1} parent=77 // pred_region
                _
              $region104: #{_drop_path_impl.1} parent=77 // pred_fallthru
                _
            $region78: #{_drop_path_impl.1} parent=73 // pred_fallthru
              _
            // Predicated region
            $region79: #{_drop_path_impl.1} parent=73 // pred_check
              _
            $region80: #{_drop_path_impl.1} parent=73 // pred_check_branch
              %327 = sbr.rel target = $region82
            $region81: #{_drop_path_impl.1} parent=73 // pred_region
              // While loop
              $region83: #{_drop_path_impl.1} parent=81 // loop_pre_header
                _
              $region84: #{_drop_path_impl.1} parent=81 // loop_header
                %s330 = sphi 0, %s332
                %p331 = scmp.ge.s32.totalorder %s330, %s313
                %s335 = sphi 0, %s342
                %s336 = sphi %s307, %s345
                %s337 = sphi %s320, %s346
              $region85: #{_drop_path_impl.1} parent=81 // loop_header_branch
                %334 = sbr.rel (%p331) target = $region89
              $region86: #{_drop_path_impl.1} parent=81 // loop_body
                %v338 = vld [vmem:[%s336] sm:$0xff]
                %339 = vst [vmem:[%s337] sm:$0xff] %v338
                %s340 = sadd.s32 1, %s335
                %p341 = scmp.ge.s32.totalorder %s340, %s313
                %s342 = scalar_select %p341, 0, %s340
                %s343 = smul.u32 %s342, 8
                %s344 = smul.u32 %s342, 16
                %s345 = scalar_lea.vmem %s307, %s343 [#allocation3]
                %s346 = scalar_lea.vmem %s320, %s344
              $region87: #{_drop_path_impl.1} parent=81 // loop_footer
                %s332 = sadd.s32 %s330, 1
              $region88: #{_drop_path_impl.1} parent=81 // loop_footer_branch
                %329 = sbr.rel target = $region84
              $region89: #{_drop_path_impl.1} parent=81 // loop_exit
                _
            $region82: #{_drop_path_impl.1} parent=73 // pred_fallthru
              _
          $region74: #{_drop_path_impl.1} parent=69 // pred_fallthru
            _
          %369 = vnop
        $region70: #{_drop_path_impl.1} parent=61 // pred_fallthru
          _
      $region62: #{_drop_path_impl.1} parent=5 // pred_fallthru
        _
      %p370 = scmp.le.s32.totalorder 2, %s8
      // Predicated region
      $region105: #{_drop_path_impl.1} parent=5 // pred_check
        %p371 = pneg %p370
      $region106: #{_drop_path_impl.1} parent=5 // pred_check_branch
        %373 = sbr.rel (%p371) target = $region108
      $region107: #{_drop_path_impl.1} parent=5 // pred_region
        %s374 = ssub.s32 %s8, 2
        // Predicated region
        $region109: #{_drop_path_impl.1} parent=107 // pred_check
          %p375 = pneg %p105
        $region110: #{_drop_path_impl.1} parent=107 // pred_check_branch
          %377 = sbr.rel (%p375) target = $region112
        $region111: #{_drop_path_impl.1} parent=107 // pred_region
          %s378 = sand.u32 %s90, 1
          %s379 = sand.u32 %s90, 1
          %s380 = smul.addr %s379, 32
          %s381 = scalar_lea.vmem [#allocation3], %s380
        $region112: #{_drop_path_impl.1} parent=107 // pred_fallthru
          _
      $region108: #{_drop_path_impl.1} parent=5 // pred_fallthru
        _
    $region6: #{_drop_path_impl.1} parent=1 // loop_footer
      %s12 = sadd.s32 1, %s8
    $region7: #{_drop_path_impl.1} parent=1 // loop_footer_branch
      %7 = sbr.rel target = $region3
    $region8: #{_drop_path_impl.1} parent=1 // loop_exit
      _

</llo_original>
